<compile_context>
chip_gen: v6e
topology: v6e:2x2x1
jax: 0.10.0
libtpu: 0.0.40
codegen_flags: <defaults>
</compile_context>

<pallas_src>
import jax
import jax.numpy as jnp
from jax import lax
from jax.experimental import pallas as pl
from jax.experimental.pallas import tpu as pltpu

# ---------------- synthetic config (small shapes) ----------------
B, S = 2, 8              # batch, seq_len
BS = B * S
VOCAB = 16               # class_num (recon vocabulary)
EMB = 32                 # emb_size
DISTIL = 32              # distil_size
DISPER = 32              # disper_size (== distil_size so torch.cat(dim=1) is valid)
DISTIL_NUM = 16          # distill_num codebook entries (KT)
DISPER_NUM = 8           # disper_num  codebook entries (KP)
HID = 32                 # decoder hidden
COMIT_COEF = 0.25        # comit_coef
LANES = 128
KT, KP = DISTIL_NUM, DISPER_NUM
ENC_OUT = 2 * DISTIL + 2 * DISPER        # 128 (== LANES)

# ---- packed parameter slab row offsets (row blocks 8-aligned) ----
R_EMB  = 0               # emb_table               [VOCAB, EMB]
R_ENCW = 16              # stacked encoder weights [EMB, 128]  (t_wz | t_wv | p_wz | p_wv)
R_BIAS = 48              # row 48: enc_b, 49: [||e_t||^2 | ||e_p||^2], 50: dec_b1, 51: dec_bo(pad)
R_WVQ  = 56              # fused VQ score weight   [128, KT+KP]  (carries the -2 factor)
R_CBT  = 184             # codebook_t              [KT, DISTIL]
R_CBP  = 200             # codebook_p              [KP, DISPER]
R_W1   = 208             # dec_w1                  [EMB, HID]
R_W2A  = 240             # dec_w2 (z_t half)       [DISTIL, HID]
R_W2B  = 272             # dec_w2 (z_p half)       [DISPER, HID]
R_WO   = 304             # dec_wo padded           [HID, 128]
R_SEL  = 336             # batch selector          [BS, B]      (z -> per-position broadcast)
P_ROWS = 352

# ---- packed data / output slab layouts ----
DATA_ROWS = 24           # rows 0:BS one-hot tokens, rows BS:BS+B pooling weights
OUT_ROWS  = 24           # rows 0:BS logits, BS:BS+B enc_out, BS+B loss row, rest zeros


# ---------------- fused forward kernel ----------------
def fused_kernel(data_ref, p_ref, out_ref):
    f32 = jnp.float32

    # ---- runtime data (single slab) ----
    onehot = data_ref[0:BS, 0:VOCAB]                # [BS, VOCAB] one-hot tokens
    pool_w = data_ref[BS:BS + B, 0:BS]              # [B, BS] block-diag mask/denom

    # ---- parameters (static views into the single packed slab) ----
    emb    = p_ref[R_EMB:R_EMB + VOCAB, 0:EMB]          # [VOCAB, EMB]
    enc_w  = p_ref[R_ENCW:R_ENCW + EMB, :]              # [EMB, 128]  (ENC_OUT == 128)
    enc_b  = p_ref[R_BIAS:R_BIAS + 1, :]                # [1, 128]
    vq_b   = p_ref[R_BIAS + 1:R_BIAS + 2, 0:KT + KP]    # [1, KT+KP]  ||e||^2 (precomputed)
    dec_b1 = p_ref[R_BIAS + 2:R_BIAS + 3, 0:HID]        # [1, HID]
    dec_bo = p_ref[R_BIAS + 3:R_BIAS + 4, :]            # [1, 128]   (zero-padded)
    w_vq   = p_ref[R_WVQ:R_WVQ + ENC_OUT, 0:KT + KP]    # [128, KT+KP] block-structured
    cbt    = p_ref[R_CBT:R_CBT + KT, 0:DISTIL]          # [KT, DISTIL]
    cbp    = p_ref[R_CBP:R_CBP + KP, 0:DISPER]          # [KP, DISPER]
    w1     = p_ref[R_W1:R_W1 + EMB, 0:HID]              # [EMB, HID]
    w2a    = p_ref[R_W2A:R_W2A + DISTIL, 0:HID]         # [DISTIL, HID]
    w2b    = p_ref[R_W2B:R_W2B + DISPER, 0:HID]         # [DISPER, HID]
    wo     = p_ref[R_WO:R_WO + HID, :]                  # [HID, 128] (zero-padded lanes)
    sel    = p_ref[R_SEL:R_SEL + BS, 0:B]               # [BS, B] position->batch selector

    # ---- embedding gather on the MXU: onehot(inputs) @ emb_table ----
    x_flat = jnp.dot(onehot, emb, preferred_element_type=f32)           # [BS, EMB]

    # ---- masked mean pooling as a matmul (no 3D reshape / VPU reduce) ----
    pooled = jnp.dot(pool_w, x_flat, preferred_element_type=f32)        # [B, EMB]

    # ---- stacked encoder projections: z_t | var_t | z_p | var_p ----
    enc_out = jnp.dot(pooled, enc_w, preferred_element_type=f32) + enc_b   # [B, 128]
    z_t = enc_out[:, 0:DISTIL]
    z_p = enc_out[:, 2 * DISTIL:2 * DISTIL + DISPER]
    # var_t / var_p heads (lanes 32:64 / 96:128) are computed but unused (smooth=False)

    # ---- VQ nearest-neighbour: ONE fused score matmul for both codebooks ----
    # score[:, :KT] = ||e_t||^2 - 2 z_t e_t^T ; score[:, KT:] = ||e_p||^2 - 2 z_p e_p^T
    # (the per-row ||z||^2 term does not change the argmin, so it is dropped)
    score = jnp.dot(enc_out, w_vq, preferred_element_type=f32) + vq_b      # [B, KT+KP]

    def nearest_onehot(sc, k):
        iota = lax.broadcasted_iota(jnp.int32, sc.shape, 1)
        smin = jnp.min(sc, axis=1, keepdims=True)
        first = jnp.min(jnp.where(sc == smin, iota, k), axis=1, keepdims=True)
        return (iota == first).astype(f32)

    oh_t = nearest_onehot(score[:, 0:KT], KT)                              # [B, KT]
    oh_p = nearest_onehot(score[:, KT:KT + KP], KP)                        # [B, KP]
    # quantized values back on the (idle) MXU: one-hot matmuls
    q_t = jnp.dot(oh_t, cbt, preferred_element_type=f32)                   # [B, DISTIL]
    q_p = jnp.dot(oh_p, cbp, preferred_element_type=f32)                   # [B, DISPER]

    # forward value of mse(sg(z), e) + comit_coef * mse(z, sg(e))
    d_t = z_t - q_t
    d_p = z_p - q_p
    c_t = (1.0 + COMIT_COEF) / float(B * DISTIL)
    c_p = (1.0 + COMIT_COEF) / float(B * DISPER)
    loss_t = c_t * jnp.sum(jnp.sum(d_t * d_t, axis=1, keepdims=True),
                           axis=0, keepdims=True)                          # [1, 1]
    loss_p = c_p * jnp.sum(jnp.sum(d_p * d_p, axis=1, keepdims=True),
                           axis=0, keepdims=True)                          # [1, 1]

    # ---- decoder: per-position MLP conditioned on cat([q_t, q_p]) ----
    xproj = jnp.dot(x_flat, w1, preferred_element_type=f32)                # [BS, HID]
    zproj = (jnp.dot(q_t, w2a, preferred_element_type=f32)
             + jnp.dot(q_p, w2b, preferred_element_type=f32) + dec_b1)     # [B, HID]
    zproj_bs = jnp.dot(sel, zproj, preferred_element_type=f32)             # [BS, HID]
    h = jnp.tanh(xproj + zproj_bs)                                         # [BS, HID]
    logits = jnp.dot(h, wo, preferred_element_type=f32) + dec_bo           # [BS, 128]

    # ---- single packed, lane-dense output slab ----
    out_ref[0:BS, :] = logits                                              # recon (lanes 0:VOCAB)
    out_ref[BS:BS + B, :] = enc_out                                        # z_t / z_p views
    tail = OUT_ROWS - BS - B
    r_iota = lax.broadcasted_iota(jnp.int32, (tail, LANES), 0)
    l_iota = lax.broadcasted_iota(jnp.int32, (tail, LANES), 1)
    loss_tail = jnp.where((r_iota == 0) & (l_iota == 0), loss_t,
                          jnp.where((r_iota == 0) & (l_iota == 1), loss_p, 0.0))
    out_ref[BS + B:OUT_ROWS, :] = loss_tail                                # losses + zero pad


# ---------------- parameter init: one packed lane-dense slab ----------------
def init_params(key):
    ks = jax.random.split(key, 10)
    scale = 0.05
    nrm = lambda k, shp: scale * jax.random.normal(k, shp, jnp.float32)

    emb_table = nrm(ks[0], (VOCAB, EMB))
    enc_t_wz = nrm(ks[1], (EMB, DISTIL))
    enc_t_wv = nrm(ks[2], (EMB, DISTIL))
    enc_p_wz = nrm(ks[3], (EMB, DISPER))
    enc_p_wv = nrm(ks[4], (EMB, DISPER))
    enc_w = jnp.concatenate([enc_t_wz, enc_t_wv, enc_p_wz, enc_p_wv], axis=1)  # [EMB, 128]
    codebook_t = nrm(ks[5], (DISTIL_NUM, DISTIL))
    codebook_p = nrm(ks[6], (DISPER_NUM, DISPER))
    dec_w1 = nrm(ks[7], (EMB, HID))
    dec_w2 = nrm(ks[8], (2 * DISTIL, HID))
    dec_wo = nrm(ks[9], (HID, VOCAB))

    slab = jnp.zeros((P_ROWS, LANES), jnp.float32)
    slab = slab.at[R_EMB:R_EMB + VOCAB, 0:EMB].set(emb_table)
    slab = slab.at[R_ENCW:R_ENCW + EMB, 0:ENC_OUT].set(enc_w)
    # row R_BIAS: enc_b (zeros) already there; row +1: precomputed ||e||^2 bias
    slab = slab.at[R_BIAS + 1, 0:KT].set(jnp.sum(codebook_t ** 2, axis=1))
    slab = slab.at[R_BIAS + 1, KT:KT + KP].set(jnp.sum(codebook_p ** 2, axis=1))
    # rows +2 (dec_b1) and +3 (dec_bo) are zeros already.
    # fused VQ score weight: -2 * e^T placed on the z_t / z_p lane blocks of enc_out
    slab = slab.at[R_WVQ:R_WVQ + DISTIL, 0:KT].set(-2.0 * codebook_t.T)
    slab = slab.at[R_WVQ + 2 * DISTIL:R_WVQ + 2 * DISTIL + DISPER,
                   KT:KT + KP].set(-2.0 * codebook_p.T)
    slab = slab.at[R_CBT:R_CBT + KT, 0:DISTIL].set(codebook_t)
    slab = slab.at[R_CBP:R_CBP + KP, 0:DISPER].set(codebook_p)
    slab = slab.at[R_W1:R_W1 + EMB, 0:HID].set(dec_w1)
    slab = slab.at[R_W2A:R_W2A + DISTIL, 0:HID].set(dec_w2[0:DISTIL])
    slab = slab.at[R_W2B:R_W2B + DISPER, 0:HID].set(dec_w2[DISTIL:])
    slab = slab.at[R_WO:R_WO + HID, 0:VOCAB].set(dec_wo)
    slab = slab.at[R_SEL:R_SEL + BS, 0:B].set(
        jnp.repeat(jnp.eye(B, dtype=jnp.float32), S, axis=0))
    return {'param_slab': slab}


# ---------------- full forward (mirrors VQ_VAE_Idx.forward) ----------------
@jax.jit
def vq_vae_idx_forward(params, inputs, x_pad_mask):
    # fold idx + mask into ONE small lane-dense data slab (tiny fused XLA prologue)
    onehot_x = jax.nn.one_hot(inputs.reshape(-1), VOCAB, dtype=jnp.float32)     # [BS, VOCAB]
    m = x_pad_mask.astype(jnp.float32)
    denom = jnp.maximum(jnp.sum(m, axis=1, keepdims=True), 1.0)
    pool_w = ((m / denom)[:, None, :]
              * jnp.eye(B, dtype=jnp.float32)[:, :, None]).reshape(B, BS)       # [B, BS]
    data = jnp.zeros((DATA_ROWS, LANES), jnp.float32)
    data = data.at[0:BS, 0:VOCAB].set(onehot_x)
    data = data.at[BS:BS + B, 0:BS].set(pool_w)

    out = pl.pallas_call(
        fused_kernel,
        out_shape=jax.ShapeDtypeStruct((OUT_ROWS, LANES), jnp.float32),
        in_specs=[pl.BlockSpec(memory_space=pltpu.MemorySpace.VMEM)] * 2,
        out_specs=pl.BlockSpec(memory_space=pltpu.MemorySpace.VMEM),
    )(data, params['param_slab'])

    recon = out[0:BS, 0:VOCAB].reshape(B, S, VOCAB)                  # [B, S, class_num]
    z_t = out[BS:BS + B, 0:DISTIL]                                   # [B, DISTIL]
    z_p = out[BS:BS + B, 2 * DISTIL:2 * DISTIL + DISPER]             # [B, DISPER]
    return {'recon_result': recon,
            'z_t': z_t, 'z_p': z_p,
            'loss_t': out[BS + B, 0], 'loss_p': out[BS + B, 1]}


if __name__ == "__main__":
    key = jax.random.PRNGKey(0)
    pkey, ikey = jax.random.split(key)
    params = init_params(pkey)

    # deterministic inputs: token indices [B,S] and a pad mask [B,S]
    inputs = jax.random.randint(ikey, (B, S), 0, VOCAB, dtype=jnp.int32)
    x_pad_mask = jnp.array([[1] * 6 + [0] * 2,
                            [1] * 8], dtype=jnp.float32)             # [B, S]

    out = vq_vae_idx_forward(params, inputs, x_pad_mask)
    jax.block_until_ready(out)

    assert out['recon_result'].shape == (B, S, VOCAB)
    assert out['z_t'].shape == (B, DISTIL)
    assert out['z_p'].shape == (B, DISPER)
    assert bool(jnp.isfinite(out['loss_t'])) and bool(jnp.isfinite(out['loss_p']))
    print("KERNEL_OK")
</pallas_src>

<mosaic_0001>
module attributes {stable_mosaic.version = 11 : i64} {
  func.func @fused_kernel(%arg0: memref<24x128xf32, #tpu.memory_space<vmem>>, %arg1: memref<352x128xf32, #tpu.memory_space<vmem>>, %arg2: memref<24x128xf32, #tpu.memory_space<vmem>>) attributes {dimension_semantics = [], scalar_prefetch = 0 : i64, scratch_operands = 0 : i64, tpu.core_type = #tpu.core_type<tc>} {
    %c0 = arith.constant 0 : index
    %c0_0 = arith.constant 0 : index
    %0 = vector.load %arg0[%c0, %c0_0] : memref<24x128xf32, #tpu.memory_space<vmem>>, vector<16x16xf32>
    %c16 = arith.constant 16 : index
    %c0_1 = arith.constant 0 : index
    %1 = vector.load %arg0[%c16, %c0_1] : memref<24x128xf32, #tpu.memory_space<vmem>>, vector<2x16xf32>
    %c0_2 = arith.constant 0 : index
    %c0_3 = arith.constant 0 : index
    %2 = vector.load %arg1[%c0_2, %c0_3] : memref<352x128xf32, #tpu.memory_space<vmem>>, vector<16x32xf32>
    %c16_4 = arith.constant 16 : index
    %c0_5 = arith.constant 0 : index
    %3 = vector.load %arg1[%c16_4, %c0_5] : memref<352x128xf32, #tpu.memory_space<vmem>>, vector<32x128xf32>
    %c48 = arith.constant 48 : index
    %c0_6 = arith.constant 0 : index
    %4 = vector.load %arg1[%c48, %c0_6] : memref<352x128xf32, #tpu.memory_space<vmem>>, vector<1x128xf32>
    %c49 = arith.constant 49 : index
    %c0_7 = arith.constant 0 : index
    %5 = vector.load %arg1[%c49, %c0_7] : memref<352x128xf32, #tpu.memory_space<vmem>>, vector<1x24xf32>
    %c50 = arith.constant 50 : index
    %c0_8 = arith.constant 0 : index
    %6 = vector.load %arg1[%c50, %c0_8] : memref<352x128xf32, #tpu.memory_space<vmem>>, vector<1x32xf32>
    %c51 = arith.constant 51 : index
    %c0_9 = arith.constant 0 : index
    %7 = vector.load %arg1[%c51, %c0_9] : memref<352x128xf32, #tpu.memory_space<vmem>>, vector<1x128xf32>
    %c56 = arith.constant 56 : index
    %c0_10 = arith.constant 0 : index
    %8 = vector.load %arg1[%c56, %c0_10] : memref<352x128xf32, #tpu.memory_space<vmem>>, vector<128x24xf32>
    %c184 = arith.constant 184 : index
    %c0_11 = arith.constant 0 : index
    %9 = vector.load %arg1[%c184, %c0_11] : memref<352x128xf32, #tpu.memory_space<vmem>>, vector<16x32xf32>
    %c200 = arith.constant 200 : index
    %c0_12 = arith.constant 0 : index
    %10 = vector.load %arg1[%c200, %c0_12] : memref<352x128xf32, #tpu.memory_space<vmem>>, vector<8x32xf32>
    %c208 = arith.constant 208 : index
    %c0_13 = arith.constant 0 : index
    %11 = vector.load %arg1[%c208, %c0_13] : memref<352x128xf32, #tpu.memory_space<vmem>>, vector<32x32xf32>
    %c240 = arith.constant 240 : index
    %c0_14 = arith.constant 0 : index
    %12 = vector.load %arg1[%c240, %c0_14] : memref<352x128xf32, #tpu.memory_space<vmem>>, vector<32x32xf32>
    %c272 = arith.constant 272 : index
    %c0_15 = arith.constant 0 : index
    %13 = vector.load %arg1[%c272, %c0_15] : memref<352x128xf32, #tpu.memory_space<vmem>>, vector<32x32xf32>
    %c304 = arith.constant 304 : index
    %c0_16 = arith.constant 0 : index
    %14 = vector.load %arg1[%c304, %c0_16] : memref<352x128xf32, #tpu.memory_space<vmem>>, vector<32x128xf32>
    %c336 = arith.constant 336 : index
    %c0_17 = arith.constant 0 : index
    %15 = vector.load %arg1[%c336, %c0_17] : memref<352x128xf32, #tpu.memory_space<vmem>>, vector<16x2xf32>
    %cst = arith.constant dense<0.000000e+00> : vector<16x32xf32>
    %16 = tpu.matmul %0, %2, %cst {dimension_numbers = #tpu.dot_dimension_numbers<[1], [0], [0], [1], [0, 0, 1, 1], [], []>} : vector<16x16xf32>, vector<16x32xf32>, vector<16x32xf32> -> vector<16x32xf32>
    %cst_18 = arith.constant dense<0.000000e+00> : vector<2x32xf32>
    %17 = tpu.matmul %1, %16, %cst_18 {dimension_numbers = #tpu.dot_dimension_numbers<[1], [0], [0], [1], [0, 0, 1, 1], [], []>} : vector<2x16xf32>, vector<16x32xf32>, vector<2x32xf32> -> vector<2x32xf32>
    %cst_19 = arith.constant dense<0.000000e+00> : vector<2x128xf32>
    %18 = tpu.matmul %17, %3, %cst_19 {dimension_numbers = #tpu.dot_dimension_numbers<[1], [0], [0], [1], [0, 0, 1, 1], [], []>} : vector<2x32xf32>, vector<32x128xf32>, vector<2x128xf32> -> vector<2x128xf32>
    %19 = vector.broadcast %4 : vector<1x128xf32> to vector<2x128xf32>
    %20 = arith.addf %18, %19 : vector<2x128xf32>
    %21 = vector.extract_strided_slice %20 {offsets = [0, 0], sizes = [2, 32], strides = [1, 1]} : vector<2x128xf32> to vector<2x32xf32>
    %22 = vector.extract_strided_slice %20 {offsets = [0, 64], sizes = [2, 32], strides = [1, 1]} : vector<2x128xf32> to vector<2x32xf32>
    %cst_20 = arith.constant dense<0.000000e+00> : vector<2x24xf32>
    %23 = tpu.matmul %20, %8, %cst_20 {dimension_numbers = #tpu.dot_dimension_numbers<[1], [0], [0], [1], [0, 0, 1, 1], [], []>} : vector<2x128xf32>, vector<128x24xf32>, vector<2x24xf32> -> vector<2x24xf32>
    %24 = vector.broadcast %5 : vector<1x24xf32> to vector<2x24xf32>
    %25 = arith.addf %23, %24 : vector<2x24xf32>
    %26 = vector.extract_strided_slice %25 {offsets = [0, 0], sizes = [2, 16], strides = [1, 1]} : vector<2x24xf32> to vector<2x16xf32>
    %27 = tpu.iota {dimensions = array<i32: 1>} : vector<2x16xi32>
    %cst_21 = arith.constant dense<0x7F800000> : vector<2xf32>
    %28 = vector.multi_reduction <minimumf>, %26, %cst_21 [1] : vector<2x16xf32> to vector<2xf32>
    %29 = vector.shape_cast %28 : vector<2xf32> to vector<2x1xf32>
    %30 = vector.broadcast %29 : vector<2x1xf32> to vector<2x16xf32>
    %31 = arith.cmpf oeq, %26, %30 : vector<2x16xf32>
    %c16_i32 = arith.constant 16 : i32
    %32 = vector.broadcast %c16_i32 : i32 to vector<2x16xi32>
    %33 = arith.select %31, %27, %32 : vector<2x16xi1>, vector<2x16xi32>
    %cst_22 = arith.constant dense<2147483647> : vector<2xi32>
    %34 = vector.multi_reduction <minsi>, %33, %cst_22 [1] : vector<2x16xi32> to vector<2xi32>
    %35 = vector.shape_cast %34 : vector<2xi32> to vector<2x1xi32>
    %36 = vector.broadcast %35 : vector<2x1xi32> to vector<2x16xi32>
    %37 = arith.cmpi eq, %27, %36 : vector<2x16xi32>
    %38 = arith.extui %37 : vector<2x16xi1> to vector<2x16xi32>
    %39 = arith.sitofp %38 : vector<2x16xi32> to vector<2x16xf32>
    %40 = vector.extract_strided_slice %25 {offsets = [0, 16], sizes = [2, 8], strides = [1, 1]} : vector<2x24xf32> to vector<2x8xf32>
    %41 = tpu.iota {dimensions = array<i32: 1>} : vector<2x8xi32>
    %cst_23 = arith.constant dense<0x7F800000> : vector<2xf32>
    %42 = vector.multi_reduction <minimumf>, %40, %cst_23 [1] : vector<2x8xf32> to vector<2xf32>
    %43 = vector.shape_cast %42 : vector<2xf32> to vector<2x1xf32>
    %44 = vector.broadcast %43 : vector<2x1xf32> to vector<2x8xf32>
    %45 = arith.cmpf oeq, %40, %44 : vector<2x8xf32>
    %c8_i32 = arith.constant 8 : i32
    %46 = vector.broadcast %c8_i32 : i32 to vector<2x8xi32>
    %47 = arith.select %45, %41, %46 : vector<2x8xi1>, vector<2x8xi32>
    %cst_24 = arith.constant dense<2147483647> : vector<2xi32>
    %48 = vector.multi_reduction <minsi>, %47, %cst_24 [1] : vector<2x8xi32> to vector<2xi32>
    %49 = vector.shape_cast %48 : vector<2xi32> to vector<2x1xi32>
    %50 = vector.broadcast %49 : vector<2x1xi32> to vector<2x8xi32>
    %51 = arith.cmpi eq, %41, %50 : vector<2x8xi32>
    %52 = arith.extui %51 : vector<2x8xi1> to vector<2x8xi32>
    %53 = arith.sitofp %52 : vector<2x8xi32> to vector<2x8xf32>
    %cst_25 = arith.constant dense<0.000000e+00> : vector<2x32xf32>
    %54 = tpu.matmul %39, %9, %cst_25 {dimension_numbers = #tpu.dot_dimension_numbers<[1], [0], [0], [1], [0, 0, 1, 1], [], []>} : vector<2x16xf32>, vector<16x32xf32>, vector<2x32xf32> -> vector<2x32xf32>
    %cst_26 = arith.constant dense<0.000000e+00> : vector<2x32xf32>
    %55 = tpu.matmul %53, %10, %cst_26 {dimension_numbers = #tpu.dot_dimension_numbers<[1], [0], [0], [1], [0, 0, 1, 1], [], []>} : vector<2x8xf32>, vector<8x32xf32>, vector<2x32xf32> -> vector<2x32xf32>
    %56 = arith.subf %21, %54 : vector<2x32xf32>
    %57 = arith.subf %22, %55 : vector<2x32xf32>
    %58 = arith.mulf %56, %56 : vector<2x32xf32>
    %cst_27 = arith.constant dense<0.000000e+00> : vector<2xf32>
    %59 = vector.multi_reduction <add>, %58, %cst_27 [1] : vector<2x32xf32> to vector<2xf32>
    %60 = vector.shape_cast %59 : vector<2xf32> to vector<2x1xf32>
    %cst_28 = arith.constant dense<0.000000e+00> : vector<1xf32>
    %61 = vector.multi_reduction <add>, %60, %cst_28 [0] : vector<2x1xf32> to vector<1xf32>
    %62 = vector.shape_cast %61 : vector<1xf32> to vector<1x1xf32>
    %cst_29 = arith.constant 0.01953125 : f32
    %63 = vector.broadcast %cst_29 : f32 to vector<1x1xf32>
    %64 = arith.mulf %63, %62 : vector<1x1xf32>
    %65 = arith.mulf %57, %57 : vector<2x32xf32>
    %cst_30 = arith.constant dense<0.000000e+00> : vector<2xf32>
    %66 = vector.multi_reduction <add>, %65, %cst_30 [1] : vector<2x32xf32> to vector<2xf32>
    %67 = vector.shape_cast %66 : vector<2xf32> to vector<2x1xf32>
    %cst_31 = arith.constant dense<0.000000e+00> : vector<1xf32>
    %68 = vector.multi_reduction <add>, %67, %cst_31 [0] : vector<2x1xf32> to vector<1xf32>
    %69 = vector.shape_cast %68 : vector<1xf32> to vector<1x1xf32>
    %cst_32 = arith.constant 0.01953125 : f32
    %70 = vector.broadcast %cst_32 : f32 to vector<1x1xf32>
    %71 = arith.mulf %70, %69 : vector<1x1xf32>
    %cst_33 = arith.constant dense<0.000000e+00> : vector<16x32xf32>
    %72 = tpu.matmul %16, %11, %cst_33 {dimension_numbers = #tpu.dot_dimension_numbers<[1], [0], [0], [1], [0, 0, 1, 1], [], []>} : vector<16x32xf32>, vector<32x32xf32>, vector<16x32xf32> -> vector<16x32xf32>
    %cst_34 = arith.constant dense<0.000000e+00> : vector<2x32xf32>
    %73 = tpu.matmul %54, %12, %cst_34 {dimension_numbers = #tpu.dot_dimension_numbers<[1], [0], [0], [1], [0, 0, 1, 1], [], []>} : vector<2x32xf32>, vector<32x32xf32>, vector<2x32xf32> -> vector<2x32xf32>
    %cst_35 = arith.constant dense<0.000000e+00> : vector<2x32xf32>
    %74 = tpu.matmul %55, %13, %cst_35 {dimension_numbers = #tpu.dot_dimension_numbers<[1], [0], [0], [1], [0, 0, 1, 1], [], []>} : vector<2x32xf32>, vector<32x32xf32>, vector<2x32xf32> -> vector<2x32xf32>
    %75 = arith.addf %73, %74 : vector<2x32xf32>
    %76 = vector.broadcast %6 : vector<1x32xf32> to vector<2x32xf32>
    %77 = arith.addf %75, %76 : vector<2x32xf32>
    %cst_36 = arith.constant dense<0.000000e+00> : vector<16x32xf32>
    %78 = tpu.matmul %15, %77, %cst_36 {dimension_numbers = #tpu.dot_dimension_numbers<[1], [0], [0], [1], [0, 0, 1, 1], [], []>} : vector<16x2xf32>, vector<2x32xf32>, vector<16x32xf32> -> vector<16x32xf32>
    %79 = arith.addf %72, %78 : vector<16x32xf32>
    %80 = math.tanh %79 : vector<16x32xf32>
    %cst_37 = arith.constant dense<0.000000e+00> : vector<16x128xf32>
    %81 = tpu.matmul %80, %14, %cst_37 {dimension_numbers = #tpu.dot_dimension_numbers<[1], [0], [0], [1], [0, 0, 1, 1], [], []>} : vector<16x32xf32>, vector<32x128xf32>, vector<16x128xf32> -> vector<16x128xf32>
    %82 = vector.broadcast %7 : vector<1x128xf32> to vector<16x128xf32>
    %83 = arith.addf %81, %82 : vector<16x128xf32>
    %c0_38 = arith.constant 0 : index
    %c0_39 = arith.constant 0 : index
    %84 = vector.load %arg2[%c0_38, %c0_39] : memref<24x128xf32, #tpu.memory_space<vmem>>, vector<16x128xf32>
    tpu.vector_store %arg2[%c0_38, %c0_39], %83 {strides = array<i32>} : memref<24x128xf32, #tpu.memory_space<vmem>>, vector<16x128xf32>,
    %c16_40 = arith.constant 16 : index
    %c0_41 = arith.constant 0 : index
    %85 = vector.load %arg2[%c16_40, %c0_41] : memref<24x128xf32, #tpu.memory_space<vmem>>, vector<2x128xf32>
    tpu.vector_store %arg2[%c16_40, %c0_41], %20 {strides = array<i32>} : memref<24x128xf32, #tpu.memory_space<vmem>>, vector<2x128xf32>,
    %86 = tpu.iota {dimensions = array<i32: 0>} : vector<6x128xi32>
    %87 = tpu.iota {dimensions = array<i32: 1>} : vector<6x128xi32>
    %c0_i32 = arith.constant 0 : i32
    %88 = vector.broadcast %c0_i32 : i32 to vector<6x128xi32>
    %89 = arith.cmpi eq, %86, %88 : vector<6x128xi32>
    %c0_i32_42 = arith.constant 0 : i32
    %90 = vector.broadcast %c0_i32_42 : i32 to vector<6x128xi32>
    %91 = arith.cmpi eq, %87, %90 : vector<6x128xi32>
    %92 = arith.andi %89, %91 : vector<6x128xi1>
    %c0_i32_43 = arith.constant 0 : i32
    %93 = vector.broadcast %c0_i32_43 : i32 to vector<6x128xi32>
    %94 = arith.cmpi eq, %86, %93 : vector<6x128xi32>
    %c1_i32 = arith.constant 1 : i32
    %95 = vector.broadcast %c1_i32 : i32 to vector<6x128xi32>
    %96 = arith.cmpi eq, %87, %95 : vector<6x128xi32>
    %97 = arith.andi %94, %96 : vector<6x128xi1>
    %cst_44 = arith.constant 0.000000e+00 : f32
    %98 = vector.shape_cast %71 : vector<1x1xf32> to vector<1x1xf32>
    %99 = vector.broadcast %98 : vector<1x1xf32> to vector<6x128xf32>
    %100 = vector.broadcast %cst_44 : f32 to vector<6x128xf32>
    %101 = arith.select %97, %99, %100 : vector<6x128xi1>, vector<6x128xf32>
    %102 = vector.shape_cast %64 : vector<1x1xf32> to vector<1x1xf32>
    %103 = vector.broadcast %102 : vector<1x1xf32> to vector<6x128xf32>
    %104 = arith.select %92, %103, %101 : vector<6x128xi1>, vector<6x128xf32>
    %c18 = arith.constant 18 : index
    %c0_45 = arith.constant 0 : index
    %105 = vector.load %arg2[%c18, %c0_45] : memref<24x128xf32, #tpu.memory_space<vmem>>, vector<6x128xf32>
    tpu.vector_store %arg2[%c18, %c0_45], %104 {strides = array<i32>} : memref<24x128xf32, #tpu.memory_space<vmem>>, vector<6x128xf32>,
    return
  }
}

</mosaic_0001>

<llo_original>
// kernel: eq.1
$region0: #{eq.1}
  %s0 = inlined_call_operand.hbm [shape: s32[2,8], index: 0, kind: input, shape index: {}]
  %s1 = inlined_call_operand.vmem [shape: s32[16], index: 1, kind: output, shape index: {}]
  $region1: #{eq.1} parent=0
    #allocation0 [shape = 'u8[1024]{0}', space=vmem, size = 0x400, scoped, tag = 'operand span for operand 0']
    #allocation1 [shape = 's32[1]{0}', space=sflag, size = 0x4, scoped, tag = 'scoped memory for eq.1']
    #allocation2 [shape = 'u8[4096]{0}', space=vmem, size = 0x1000, scoped, tag = 'scoped mem for output reshape']
    #allocation3 [shape = 'u8[4096]{0}', space=vmem, size = 0x1000, scoped, tag = 'scoped mem for input reshape']
    %2 = vsyncpa [#allocation1], 0
    %s4 = ssub.s32 32, 32
    %5 = vsyncadd [#allocation1], %s4
    %s7 = sshll.u32 [#allocation0], 4
    %s8 = int_to_ptr.vmem [resolvable:$true] %s7
    %10 = dma.hbm_to_vmem [thread:$0]  %s0, 32, %s8, [#allocation1]
    %11 = dma.done [#allocation1], 32
    %s13 = sshll.u32 1, 2
    %s14 = ssub.s32 %s13, 1
    %v15 = vld [vmem:[#allocation0] sm:%s14]
    %16 = vst [vmem:[#allocation3] sm:%s14] %v15
    %v17 = vld [vmem:[#allocation3] sm:$0x1]
    %vm18 = vcmask 64512
    %19 = vst.msk [vmem:[#allocation2] sm:$0x1] %vm18, %v17
    %s20 = scalar_lea.vmem [#allocation3], 1
    %v21 = vld [vmem:[%s20] sm:$0x1]
    %22 = vrot.lane.b32.xlu0 %v21, 8
    %v23 = vpop.permute.xlu0 %22
    %vm24 = vcmask 130112
    %25 = vst.msk [vmem:[#allocation2] sm:$0x1] %vm24, %v23
    %s27 = sshll.u32 1, 1
    %s28 = ssub.s32 %s27, 1
    %v30 = vld [vmem:[#allocation2] sm:%s28]
    %s31 = sshll.u32 1, 1
    %s32 = ssub.s32 %s31, 1
    %33 = vst [vmem:[%s1] sm:%s32] %v30
    %34 = vsyncpa [#allocation1], 1

// kernel: vq_vae_idx_forward.1
$region0: #{vq_vae_idx_forward.1}
  #allocation0 [shape = 'u32[]', space=smem, size = 0x4, offset = 0x4, fixed_abs, tag = 'smem constant byte address 0x4 - core index']
  #allocation1 [shape = 'u32[144,128]{1,0:T(1,128)}', space=vmem, size = 0x12000, scoped, tag = 'internal scratch']
  %s0 = inlined_call_operand.vmem [shape: f32[24,128], index: 0, kind: input, shape index: {}]
  %s1 = inlined_call_operand.hbm [shape: f32[352,128], index: 1, kind: input, shape index: {}]
  %s2 = inlined_call_operand.vmem [shape: f32[24,128], index: 2, kind: output, shape index: {}]
  %s3 = sld [smem:[#allocation0]]
  $region22: #{vq_vae_idx_forward.1} parent=0
    _
  %s5 = ssub.s32 1, %s3
  %s6 = scalar_select 0, %s5, %s3
  $region1: #{vq_vae_idx_forward.1} parent=0
    #allocation2 [shape = 'u8[180224]{0}', space=vmem, size = 0x2c000, scoped, tag = 'input window, operand 1, single buffered']
    #allocation3 [shape = 's32[1]{0}', space=sflag, size = 0x4, scoped, tag = 'scoped memory for vq_vae_idx_forward.1']
    %7 = vsyncpa [#allocation3], 0
    // Predicated region
    $region2: #{vq_vae_idx_forward.1} parent=1 // pred_check
      _
    $region3: #{vq_vae_idx_forward.1} parent=1 // pred_check_branch
      %9 = sbr.rel (0) target = $region5
    $region4: #{vq_vae_idx_forward.1} parent=1 // pred_region
      _
    $region5: #{vq_vae_idx_forward.1} parent=1 // pred_fallthru
      _
    // Predicated region
    $region6: #{vq_vae_idx_forward.1} parent=1 // pred_check
      _
    $region7: #{vq_vae_idx_forward.1} parent=1 // pred_check_branch
      %11 = sbr.rel (0) target = $region9
    $region8: #{vq_vae_idx_forward.1} parent=1 // pred_region
      %s13 = ssub.s32 5632, 5632
      %14 = vsyncadd [#allocation3], %s13
      %s15 = sshll.u32 [#allocation2], 4
      %s16 = int_to_ptr.vmem [resolvable:$true] %s15
      %21 = dma.hbm_to_vmem [thread:$0]  %s1, 5632, %s16, [#allocation3], 128, 128, 8
    $region9: #{vq_vae_idx_forward.1} parent=1 // pred_fallthru
      _
    // Predicated region
    $region10: #{vq_vae_idx_forward.1} parent=1 // pred_check
      _
    $region11: #{vq_vae_idx_forward.1} parent=1 // pred_check_branch
      %23 = sbr.rel (0) target = $region13
    $region12: #{vq_vae_idx_forward.1} parent=1 // pred_region
      %24 = dma.done [#allocation3], 5632
    $region13: #{vq_vae_idx_forward.1} parent=1 // pred_fallthru
      _
    %v25 = vld [vmem:[%s0] sm:$0xff]
    %v26 = vld [vmem:[%s0 + $0x8] sm:$0xff]
    %v27 = vld [vmem:[%s0 + $0x10] sm:$0x3]
    %v28 = vld [vmem:[#allocation2] sm:$0xff]
    %v29 = vld [vmem:[#allocation2 + $0x8] sm:$0xff]
    %v30 = vld [vmem:[#allocation2 + $0x10] sm:$0xff]
    %v31 = vld [vmem:[#allocation2 + $0x18] sm:$0xff]
    %v32 = vld [vmem:[#allocation2 + $0x20] sm:$0xff]
    %v33 = vld [vmem:[#allocation2 + $0x28] sm:$0xff]
    %v34 = vld [vmem:[#allocation2 + $0x30] sm:$0x1]
    %v35 = vld [vmem:[#allocation2 + $0x31] sm:$0x1]
    %v36 = vld [vmem:[#allocation2 + $0x32] sm:$0x1]
    %v37 = vld [vmem:[#allocation2 + $0x33] sm:$0x1]
    %v38 = vld [vmem:[#allocation2 + $0x38] sm:$0xff]
    %v39 = vld [vmem:[#allocation2 + $0x40] sm:$0xff]
    %v40 = vld [vmem:[#allocation2 + $0x48] sm:$0xff]
    %v41 = vld [vmem:[#allocation2 + $0x50] sm:$0xff]
    %v42 = vld [vmem:[#allocation2 + $0x58] sm:$0xff]
    %v43 = vld [vmem:[#allocation2 + $0x60] sm:$0xff]
    %v44 = vld [vmem:[#allocation2 + $0x68] sm:$0xff]
    %v45 = vld [vmem:[#allocation2 + $0x70] sm:$0xff]
    %v46 = vld [vmem:[#allocation2 + $0x78] sm:$0xff]
    %v47 = vld [vmem:[#allocation2 + $0x80] sm:$0xff]
    %v48 = vld [vmem:[#allocation2 + $0x88] sm:$0xff]
    %v49 = vld [vmem:[#allocation2 + $0x90] sm:$0xff]
    %v50 = vld [vmem:[#allocation2 + $0x98] sm:$0xff]
    %v51 = vld [vmem:[#allocation2 + $0xa0] sm:$0xff]
    %v52 = vld [vmem:[#allocation2 + $0xa8] sm:$0xff]
    %v53 = vld [vmem:[#allocation2 + $0xb0] sm:$0xff]
    %v54 = vld [vmem:[#allocation2 + $0xb8] sm:$0xff]
    %v55 = vld [vmem:[#allocation2 + $0xc0] sm:$0xff]
    %v56 = vld [vmem:[#allocation2 + $0xc8] sm:$0xff]
    %v57 = vld [vmem:[#allocation2 + $0xd0] sm:$0xff]
    %v58 = vld [vmem:[#allocation2 + $0xd8] sm:$0xff]
    %v59 = vld [vmem:[#allocation2 + $0xe0] sm:$0xff]
    %v60 = vld [vmem:[#allocation2 + $0xe8] sm:$0xff]
    %v61 = vld [vmem:[#allocation2 + $0xf0] sm:$0xff]
    %v62 = vld [vmem:[#allocation2 + $0xf8] sm:$0xff]
    %v63 = vld [vmem:[#allocation2 + $0x100] sm:$0xff]
    %v64 = vld [vmem:[#allocation2 + $0x108] sm:$0xff]
    %v65 = vld [vmem:[#allocation2 + $0x110] sm:$0xff]
    %v66 = vld [vmem:[#allocation2 + $0x118] sm:$0xff]
    %v67 = vld [vmem:[#allocation2 + $0x120] sm:$0xff]
    %v68 = vld [vmem:[#allocation2 + $0x128] sm:$0xff]
    %v69 = vld [vmem:[#allocation2 + $0x130] sm:$0xff]
    %v70 = vld [vmem:[#allocation2 + $0x138] sm:$0xff]
    %v71 = vld [vmem:[#allocation2 + $0x140] sm:$0xff]
    %v72 = vld [vmem:[#allocation2 + $0x148] sm:$0xff]
    %v73 = vld [vmem:[#allocation2 + $0x150] sm:$0xff]
    %v74 = vld [vmem:[#allocation2 + $0x158] sm:$0xff]
    %vm75 = vcmask 130048
    %v77 = vsel %vm75, %v25, 0
    %v80 = vsel %vm75, %v26, 0
    %82 = vmatprep.subr.mxu0 0.0
    %83 = vmatpush1.msra.mxu0 0.0
    %84 = vmatprep.subr.mxu0 0.0
    %85 = vmatpush1.msra.mxu0 0.0
    %86 = vmatprep.subr.mxu0 0.0
    %87 = vmatpush1.msra.mxu0 0.0
    %88 = vmatprep.subr.mxu0 0.0
    %89 = vmatpush1.msra.mxu0 0.0
    %90 = vmatprep.subr.mxu0 0.0
    %91 = vmatpush1.msra.mxu0 0.0
    %92 = vmatprep.subr.mxu0 0.0
    %93 = vmatpush1.msra.mxu0 0.0
    %94 = vmatprep.subr.mxu0 0.0
    %95 = vmatpush1.msra.mxu0 0.0
    %96 = vmatprep.subr.mxu0 0.0
    %97 = vmatpush1.msra.mxu0 0.0
    %98 = vmatprep.subr.mxu0 0.0
    %99 = vmatpush1.msra.mxu0 0.0
    %100 = vmatprep.subr.mxu0 0.0
    %101 = vmatpush1.msra.mxu0 0.0
    %102 = vmatprep.subr.mxu0 0.0
    %103 = vmatpush1.msra.mxu0 0.0
    %104 = vmatprep.subr.mxu0 0.0
    %105 = vmatpush1.msra.mxu0 0.0
    %106 = vmatprep.subr.mxu0 0.0
    %107 = vmatpush1.msra.mxu0 0.0
    %108 = vmatprep.subr.mxu0 0.0
    %109 = vmatpush1.msra.mxu0 0.0
    %110 = vmatprep.subr.mxu0 0.0
    %111 = vmatpush1.msra.mxu0 %v29
    %112 = vmatprep.subr.mxu0 0.0
    %113 = vmatpush1.msra.mxu0 %v28
    %114 = vmatprep.subr.mxu0 0.0
    %115 = vmatpush2.msra.mxu0 0.0
    %116 = vmatprep.subr.mxu0 0.0
    %117 = vmatpush2.msra.mxu0 0.0
    %118 = vmatprep.subr.mxu0 0.0
    %119 = vmatpush2.msra.mxu0 0.0
    %120 = vmatprep.subr.mxu0 0.0
    %121 = vmatpush2.msra.mxu0 0.0
    %122 = vmatprep.subr.mxu0 0.0
    %123 = vmatpush2.msra.mxu0 0.0
    %124 = vmatprep.subr.mxu0 0.0
    %125 = vmatpush2.msra.mxu0 0.0
    %126 = vmatprep.subr.mxu0 0.0
    %127 = vmatpush2.msra.mxu0 0.0
    %128 = vmatprep.subr.mxu0 0.0
    %129 = vmatpush2.msra.mxu0 0.0
    %130 = vmatprep.subr.mxu0 0.0
    %131 = vmatpush2.msra.mxu0 0.0
    %132 = vmatprep.subr.mxu0 0.0
    %133 = vmatpush2.msra.mxu0 0.0
    %134 = vmatprep.subr.mxu0 0.0
    %135 = vmatpush2.msra.mxu0 0.0
    %136 = vmatprep.subr.mxu0 0.0
    %137 = vmatpush2.msra.mxu0 0.0
    %138 = vmatprep.subr.mxu0 0.0
    %139 = vmatpush2.msra.mxu0 0.0
    %140 = vmatprep.subr.mxu0 0.0
    %141 = vmatpush2.msra.mxu0 0.0
    %142 = vmatprep.subr.mxu0 0.0
    %143 = vmatpush2.msra.mxu0 0.0
    %144 = vmatprep.subr.mxu0 0.0
    %145 = vmatpush2.msra.mxu0 0.0
    %146 = vmatprep.mubr.f32.mxu0 0.0
    %147 = vmatmul.mubr.f32.gmra.mxu0 %v77
    %v148 = vpop.f32.mrf.mxu0
    %v149 = vadd.f32 0.0, %v148
    %v150 = vpop.f32.mrf.mxu0
    %151 = vmatprep.mubr.f32.mxu0 0.0
    %152 = vmatmul.mubr.f32.gmra.mxu0 %v80
    %v153 = vpop.f32.mrf.mxu0
    %v154 = vadd.f32 0.0, %v153
    %v155 = vpop.f32.mrf.mxu0
    %156 = vdwg.mxu0
    %v158 = vsel %vm75, %v27, 0
    %160 = vmatprep.subr.mxu0 0.0
    %161 = vmatpush1.msra.mxu0 0.0
    %162 = vmatprep.subr.mxu0 0.0
    %163 = vmatpush1.msra.mxu0 0.0
    %164 = vmatprep.subr.mxu0 0.0
    %165 = vmatpush1.msra.mxu0 0.0
    %166 = vmatprep.subr.mxu0 0.0
    %167 = vmatpush1.msra.mxu0 0.0
    %168 = vmatprep.subr.mxu0 0.0
    %169 = vmatpush1.msra.mxu0 0.0
    %170 = vmatprep.subr.mxu0 0.0
    %171 = vmatpush1.msra.mxu0 0.0
    %172 = vmatprep.subr.mxu0 0.0
    %173 = vmatpush1.msra.mxu0 0.0
    %174 = vmatprep.subr.mxu0 0.0
    %175 = vmatpush1.msra.mxu0 0.0
    %176 = vmatprep.subr.mxu0 0.0
    %177 = vmatpush1.msra.mxu0 0.0
    %178 = vmatprep.subr.mxu0 0.0
    %179 = vmatpush1.msra.mxu0 0.0
    %180 = vmatprep.subr.mxu0 0.0
    %181 = vmatpush1.msra.mxu0 0.0
    %182 = vmatprep.subr.mxu0 0.0
    %183 = vmatpush1.msra.mxu0 0.0
    %184 = vmatprep.subr.mxu0 0.0
    %185 = vmatpush1.msra.mxu0 0.0
    %186 = vmatprep.subr.mxu0 0.0
    %187 = vmatpush1.msra.mxu0 0.0
    %188 = vmatprep.subr.mxu0 0.0
    %189 = vmatpush1.msra.mxu0 %v154
    %190 = vmatprep.subr.mxu0 0.0
    %191 = vmatpush1.msra.mxu0 %v149
    %192 = vmatprep.subr.mxu0 0.0
    %193 = vmatpush2.msra.mxu0 0.0
    %194 = vmatprep.subr.mxu0 0.0
    %195 = vmatpush2.msra.mxu0 0.0
    %196 = vmatprep.subr.mxu0 0.0
    %197 = vmatpush2.msra.mxu0 0.0
    %198 = vmatprep.subr.mxu0 0.0
    %199 = vmatpush2.msra.mxu0 0.0
    %200 = vmatprep.subr.mxu0 0.0
    %201 = vmatpush2.msra.mxu0 0.0
    %202 = vmatprep.subr.mxu0 0.0
    %203 = vmatpush2.msra.mxu0 0.0
    %204 = vmatprep.subr.mxu0 0.0
    %205 = vmatpush2.msra.mxu0 0.0
    %206 = vmatprep.subr.mxu0 0.0
    %207 = vmatpush2.msra.mxu0 0.0
    %208 = vmatprep.subr.mxu0 0.0
    %209 = vmatpush2.msra.mxu0 0.0
    %210 = vmatprep.subr.mxu0 0.0
    %211 = vmatpush2.msra.mxu0 0.0
    %212 = vmatprep.subr.mxu0 0.0
    %213 = vmatpush2.msra.mxu0 0.0
    %214 = vmatprep.subr.mxu0 0.0
    %215 = vmatpush2.msra.mxu0 0.0
    %216 = vmatprep.subr.mxu0 0.0
    %217 = vmatpush2.msra.mxu0 0.0
    %218 = vmatprep.subr.mxu0 0.0
    %219 = vmatpush2.msra.mxu0 0.0
    %220 = vmatprep.subr.mxu0 0.0
    %221 = vmatpush2.msra.mxu0 0.0
    %222 = vmatprep.subr.mxu0 0.0
    %223 = vmatpush2.msra.mxu0 0.0
    %224 = vmatprep.mubr.f32.mxu0 0.0
    %225 = vmatmul.mubr.f32.gmra.mxu0 %v158
    %v226 = vpop.f32.mrf.mxu0
    %v227 = vadd.f32 0.0, %v226
    %v228 = vpop.f32.mrf.mxu0
    %229 = vdwg.mxu0
    %v230 = vlaneseq
    %v231 = vshrl.u32 %v230, 7
    %v232 = vsub.s32 0, %v231
    %v233 = vrot.slane %v34, %v232
    %vm234 = vcmask 261120
    %v236 = vsel %vm234, %v227, 0
    %238 = vmatprep.subr.mxu0 0.0
    %239 = vmatpush1.msra.mxu0 0.0
    %240 = vmatprep.subr.mxu0 0.0
    %241 = vmatpush1.msra.mxu0 0.0
    %242 = vmatprep.subr.mxu0 0.0
    %243 = vmatpush1.msra.mxu0 0.0
    %244 = vmatprep.subr.mxu0 0.0
    %245 = vmatpush1.msra.mxu0 0.0
    %246 = vmatprep.subr.mxu0 0.0
    %247 = vmatpush1.msra.mxu0 0.0
    %248 = vmatprep.subr.mxu0 0.0
    %249 = vmatpush1.msra.mxu0 0.0
    %250 = vmatprep.subr.mxu0 0.0
    %251 = vmatpush1.msra.mxu0 0.0
    %252 = vmatprep.subr.mxu0 0.0
    %253 = vmatpush1.msra.mxu0 0.0
    %254 = vmatprep.subr.mxu0 0.0
    %255 = vmatpush1.msra.mxu0 0.0
    %256 = vmatprep.subr.mxu0 0.0
    %257 = vmatpush1.msra.mxu0 0.0
    %258 = vmatprep.subr.mxu0 0.0
    %259 = vmatpush1.msra.mxu0 0.0
    %260 = vmatprep.subr.mxu0 0.0
    %261 = vmatpush1.msra.mxu0 0.0
    %262 = vmatprep.subr.mxu0 0.0
    %263 = vmatpush1.msra.mxu0 %v33
    %264 = vmatprep.subr.mxu0 0.0
    %265 = vmatpush1.msra.mxu0 %v32
    %266 = vmatprep.subr.mxu0 0.0
    %267 = vmatpush1.msra.mxu0 %v31
    %268 = vmatprep.subr.mxu0 0.0
    %269 = vmatpush1.msra.mxu0 %v30
    %270 = vmatprep.subr.mxu0 0.0
    %271 = vmatpush2.msra.mxu0 0.0
    %272 = vmatprep.subr.mxu0 0.0
    %273 = vmatpush2.msra.mxu0 0.0
    %274 = vmatprep.subr.mxu0 0.0
    %275 = vmatpush2.msra.mxu0 0.0
    %276 = vmatprep.subr.mxu0 0.0
    %277 = vmatpush2.msra.mxu0 0.0
    %278 = vmatprep.subr.mxu0 0.0
    %279 = vmatpush2.msra.mxu0 0.0
    %280 = vmatprep.subr.mxu0 0.0
    %281 = vmatpush2.msra.mxu0 0.0
    %282 = vmatprep.subr.mxu0 0.0
    %283 = vmatpush2.msra.mxu0 0.0
    %284 = vmatprep.subr.mxu0 0.0
    %285 = vmatpush2.msra.mxu0 0.0
    %286 = vmatprep.subr.mxu0 0.0
    %287 = vmatpush2.msra.mxu0 0.0
    %288 = vmatprep.subr.mxu0 0.0
    %289 = vmatpush2.msra.mxu0 0.0
    %290 = vmatprep.subr.mxu0 0.0
    %291 = vmatpush2.msra.mxu0 0.0
    %292 = vmatprep.subr.mxu0 0.0
    %293 = vmatpush2.msra.mxu0 0.0
    %294 = vmatprep.subr.mxu0 0.0
    %295 = vmatpush2.msra.mxu0 0.0
    %296 = vmatprep.subr.mxu0 0.0
    %297 = vmatpush2.msra.mxu0 0.0
    %298 = vmatprep.subr.mxu0 0.0
    %299 = vmatpush2.msra.mxu0 0.0
    %300 = vmatprep.subr.mxu0 0.0
    %301 = vmatpush2.msra.mxu0 0.0
    %302 = vmatprep.mubr.f32.mxu0 0.0
    %303 = vmatmul.mubr.f32.gmra.mxu0 %v236
    %v304 = vpop.f32.mrf.mxu0
    %v305 = vadd.f32 %v233, %v304
    %v306 = vpop.f32.mrf.mxu0
    %307 = vdwg.mxu0
    %v308 = vlaneseq
    %v309 = vshrl.u32 %v308, 7
    %v310 = vsub.s32 0, %v309
    %v311 = vrot.slane %v35, %v310
    %312 = vmatprep.subr.mxu0 0.0
    %313 = vmatpush1.msra.mxu0 %v53
    %314 = vmatprep.subr.mxu0 0.0
    %315 = vmatpush1.msra.mxu0 %v52
    %316 = vmatprep.subr.mxu0 0.0
    %317 = vmatpush1.msra.mxu0 %v51
    %318 = vmatprep.subr.mxu0 0.0
    %319 = vmatpush1.msra.mxu0 %v50
    %320 = vmatprep.subr.mxu0 0.0
    %321 = vmatpush1.msra.mxu0 %v49
    %322 = vmatprep.subr.mxu0 0.0
    %323 = vmatpush1.msra.mxu0 %v48
    %324 = vmatprep.subr.mxu0 0.0
    %325 = vmatpush1.msra.mxu0 %v47
    %326 = vmatprep.subr.mxu0 0.0
    %327 = vmatpush1.msra.mxu0 %v46
    %328 = vmatprep.subr.mxu0 0.0
    %329 = vmatpush1.msra.mxu0 %v45
    %330 = vmatprep.subr.mxu0 0.0
    %331 = vmatpush1.msra.mxu0 %v44
    %332 = vmatprep.subr.mxu0 0.0
    %333 = vmatpush1.msra.mxu0 %v43
    %334 = vmatprep.subr.mxu0 0.0
    %335 = vmatpush1.msra.mxu0 %v42
    %336 = vmatprep.subr.mxu0 0.0
    %337 = vmatpush1.msra.mxu0 %v41
    %338 = vmatprep.subr.mxu0 0.0
    %339 = vmatpush1.msra.mxu0 %v40
    %340 = vmatprep.subr.mxu0 0.0
    %341 = vmatpush1.msra.mxu0 %v39
    %342 = vmatprep.subr.mxu0 0.0
    %343 = vmatpush1.msra.mxu0 %v38
    %344 = vmatprep.subr.mxu0 0.0
    %345 = vmatpush2.msra.mxu0 0.0
    %346 = vmatprep.subr.mxu0 0.0
    %347 = vmatpush2.msra.mxu0 0.0
    %348 = vmatprep.subr.mxu0 0.0
    %349 = vmatpush2.msra.mxu0 0.0
    %350 = vmatprep.subr.mxu0 0.0
    %351 = vmatpush2.msra.mxu0 0.0
    %352 = vmatprep.subr.mxu0 0.0
    %353 = vmatpush2.msra.mxu0 0.0
    %354 = vmatprep.subr.mxu0 0.0
    %355 = vmatpush2.msra.mxu0 0.0
    %356 = vmatprep.subr.mxu0 0.0
    %357 = vmatpush2.msra.mxu0 0.0
    %358 = vmatprep.subr.mxu0 0.0
    %359 = vmatpush2.msra.mxu0 0.0
    %360 = vmatprep.subr.mxu0 0.0
    %361 = vmatpush2.msra.mxu0 0.0
    %362 = vmatprep.subr.mxu0 0.0
    %363 = vmatpush2.msra.mxu0 0.0
    %364 = vmatprep.subr.mxu0 0.0
    %365 = vmatpush2.msra.mxu0 0.0
    %366 = vmatprep.subr.mxu0 0.0
    %367 = vmatpush2.msra.mxu0 0.0
    %368 = vmatprep.subr.mxu0 0.0
    %369 = vmatpush2.msra.mxu0 0.0
    %370 = vmatprep.subr.mxu0 0.0
    %371 = vmatpush2.msra.mxu0 0.0
    %372 = vmatprep.subr.mxu0 0.0
    %373 = vmatpush2.msra.mxu0 0.0
    %374 = vmatprep.subr.mxu0 0.0
    %375 = vmatpush2.msra.mxu0 0.0
    %376 = vmatprep.mubr.f32.mxu0 0.0
    %377 = vmatmul.mubr.f32.gmra.mxu0 %v305
    %v378 = vpop.f32.mrf.mxu0
    %v379 = vadd.f32 %v311, %v378
    %v380 = vpop.f32.mrf.mxu0
    %381 = vdwg.mxu0
    %v382 = vlaneseq
    %v383 = vand.u32 %v382, 127
    %vm384 = vcmask 123904
    %v385 = vsel %vm384, %v379, inf
    %386 = vmin.xlane.f32.xlu0 %v385
    %v387 = vpop.xlane.xlu0 %386
    %vm388 = vcmp.eq.f32.partialorder %v379, %v387
    %v389 = vsel %vm388, %v383, 16
    %v390 = vsel %vm384, %v389, 2147483647
    %v391 = vand.u32 %v390, 65535
    %v392 = vshra.s32 %v390, 16
    %v393 = vcvt.s32.f32 %v391
    %v394 = vcvt.s32.f32 %v392
    %395 = vmin.xlane.f32.xlu0 %v394
    %v396 = vpop.xlane.xlu0 %395
    %vm397 = vcmp.eq.f32.partialorder %v394, %v396
    %v398 = vsel %vm397, %v393, inf
    %399 = vmin.xlane.f32.xlu0 %v398
    %v400 = vpop.xlane.xlu0 %399
    %v401 = vcvt.f32.s32 %v400
    %v402 = vcvt.f32.s32 %v396
    %v403 = vshll.u32 %v402, 16
    %v404 = vadd.s32 %v403, %v401
    %vm405 = vcmp.eq.s32.totalorder %v383, %v404
    %v406 = vsel %vm405, 1, 0
    %v407 = vcvt.s32.f32 %v406
    %vm408 = vcmask 189568
    %v409 = vsel %vm408, %v379, inf
    %410 = vmin.xlane.f32.xlu0 %v409
    %v411 = vpop.xlane.xlu0 %410
    %vm412 = vcmp.eq.f32.partialorder %v379, %v411
    %413 = vrot.lane.b32.xlu0 %v383, 16
    %v414 = vpop.permute.xlu0 %413
    %v415 = vsel %vm412, %v414, 8
    %v416 = vsel %vm408, %v415, 2147483647
    %v417 = vand.u32 %v416, 65535
    %v418 = vshra.s32 %v416, 16
    %v419 = vcvt.s32.f32 %v417
    %v420 = vcvt.s32.f32 %v418
    %421 = vmin.xlane.f32.xlu0 %v420
    %v422 = vpop.xlane.xlu0 %421
    %vm423 = vcmp.eq.f32.partialorder %v420, %v422
    %v424 = vsel %vm423, %v419, inf
    %425 = vmin.xlane.f32.xlu0 %v424
    %v426 = vpop.xlane.xlu0 %425
    %v427 = vcvt.f32.s32 %v426
    %v428 = vcvt.f32.s32 %v422
    %v429 = vshll.u32 %v428, 16
    %v430 = vadd.s32 %v429, %v427
    %vm431 = vcmp.eq.s32.totalorder %v383, %v430
    %v432 = vsel %vm431, 1, 0
    %v433 = vcvt.s32.f32 %v432
    %v435 = vsel %vm75, %v407, 0
    %437 = vmatprep.subr.mxu0 0.0
    %438 = vmatpush1.msra.mxu0 0.0
    %439 = vmatprep.subr.mxu0 0.0
    %440 = vmatpush1.msra.mxu0 0.0
    %441 = vmatprep.subr.mxu0 0.0
    %442 = vmatpush1.msra.mxu0 0.0
    %443 = vmatprep.subr.mxu0 0.0
    %444 = vmatpush1.msra.mxu0 0.0
    %445 = vmatprep.subr.mxu0 0.0
    %446 = vmatpush1.msra.mxu0 0.0
    %447 = vmatprep.subr.mxu0 0.0
    %448 = vmatpush1.msra.mxu0 0.0
    %449 = vmatprep.subr.mxu0 0.0
    %450 = vmatpush1.msra.mxu0 0.0
    %451 = vmatprep.subr.mxu0 0.0
    %452 = vmatpush1.msra.mxu0 0.0
    %453 = vmatprep.subr.mxu0 0.0
    %454 = vmatpush1.msra.mxu0 0.0
    %455 = vmatprep.subr.mxu0 0.0
    %456 = vmatpush1.msra.mxu0 0.0
    %457 = vmatprep.subr.mxu0 0.0
    %458 = vmatpush1.msra.mxu0 0.0
    %459 = vmatprep.subr.mxu0 0.0
    %460 = vmatpush1.msra.mxu0 0.0
    %461 = vmatprep.subr.mxu0 0.0
    %462 = vmatpush1.msra.mxu0 0.0
    %463 = vmatprep.subr.mxu0 0.0
    %464 = vmatpush1.msra.mxu0 0.0
    %465 = vmatprep.subr.mxu0 0.0
    %466 = vmatpush1.msra.mxu0 %v55
    %467 = vmatprep.subr.mxu0 0.0
    %468 = vmatpush1.msra.mxu0 %v54
    %469 = vmatprep.subr.mxu0 0.0
    %470 = vmatpush2.msra.mxu0 0.0
    %471 = vmatprep.subr.mxu0 0.0
    %472 = vmatpush2.msra.mxu0 0.0
    %473 = vmatprep.subr.mxu0 0.0
    %474 = vmatpush2.msra.mxu0 0.0
    %475 = vmatprep.subr.mxu0 0.0
    %476 = vmatpush2.msra.mxu0 0.0
    %477 = vmatprep.subr.mxu0 0.0
    %478 = vmatpush2.msra.mxu0 0.0
    %479 = vmatprep.subr.mxu0 0.0
    %480 = vmatpush2.msra.mxu0 0.0
    %481 = vmatprep.subr.mxu0 0.0
    %482 = vmatpush2.msra.mxu0 0.0
    %483 = vmatprep.subr.mxu0 0.0
    %484 = vmatpush2.msra.mxu0 0.0
    %485 = vmatprep.subr.mxu0 0.0
    %486 = vmatpush2.msra.mxu0 0.0
    %487 = vmatprep.subr.mxu0 0.0
    %488 = vmatpush2.msra.mxu0 0.0
    %489 = vmatprep.subr.mxu0 0.0
    %490 = vmatpush2.msra.mxu0 0.0
    %491 = vmatprep.subr.mxu0 0.0
    %492 = vmatpush2.msra.mxu0 0.0
    %493 = vmatprep.subr.mxu0 0.0
    %494 = vmatpush2.msra.mxu0 0.0
    %495 = vmatprep.subr.mxu0 0.0
    %496 = vmatpush2.msra.mxu0 0.0
    %497 = vmatprep.subr.mxu0 0.0
    %498 = vmatpush2.msra.mxu0 0.0
    %499 = vmatprep.subr.mxu0 0.0
    %500 = vmatpush2.msra.mxu0 0.0
    %501 = vmatprep.mubr.f32.mxu0 0.0
    %502 = vmatmul.mubr.f32.gmra.mxu0 %v435
    %v503 = vpop.f32.mrf.mxu0
    %v504 = vadd.f32 0.0, %v503
    %v505 = vpop.f32.mrf.mxu0
    %506 = vdwg.mxu0
    %vm507 = vcmask 64512
    %v509 = vsel %vm507, %v433, 0
    %511 = vmatprep.subr.mxu0 0.0
    %512 = vmatpush1.msra.mxu0 0.0
    %513 = vmatprep.subr.mxu0 0.0
    %514 = vmatpush1.msra.mxu0 0.0
    %515 = vmatprep.subr.mxu0 0.0
    %516 = vmatpush1.msra.mxu0 0.0
    %517 = vmatprep.subr.mxu0 0.0
    %518 = vmatpush1.msra.mxu0 0.0
    %519 = vmatprep.subr.mxu0 0.0
    %520 = vmatpush1.msra.mxu0 0.0
    %521 = vmatprep.subr.mxu0 0.0
    %522 = vmatpush1.msra.mxu0 0.0
    %523 = vmatprep.subr.mxu0 0.0
    %524 = vmatpush1.msra.mxu0 0.0
    %525 = vmatprep.subr.mxu0 0.0
    %526 = vmatpush1.msra.mxu0 0.0
    %527 = vmatprep.subr.mxu0 0.0
    %528 = vmatpush1.msra.mxu0 0.0
    %529 = vmatprep.subr.mxu0 0.0
    %530 = vmatpush1.msra.mxu0 0.0
    %531 = vmatprep.subr.mxu0 0.0
    %532 = vmatpush1.msra.mxu0 0.0
    %533 = vmatprep.subr.mxu0 0.0
    %534 = vmatpush1.msra.mxu0 0.0
    %535 = vmatprep.subr.mxu0 0.0
    %536 = vmatpush1.msra.mxu0 0.0
    %537 = vmatprep.subr.mxu0 0.0
    %538 = vmatpush1.msra.mxu0 0.0
    %539 = vmatprep.subr.mxu0 0.0
    %540 = vmatpush1.msra.mxu0 0.0
    %541 = vmatprep.subr.mxu0 0.0
    %542 = vmatpush1.msra.mxu0 %v56
    %543 = vmatprep.subr.mxu0 0.0
    %544 = vmatpush2.msra.mxu0 0.0
    %545 = vmatprep.subr.mxu0 0.0
    %546 = vmatpush2.msra.mxu0 0.0
    %547 = vmatprep.subr.mxu0 0.0
    %548 = vmatpush2.msra.mxu0 0.0
    %549 = vmatprep.subr.mxu0 0.0
    %550 = vmatpush2.msra.mxu0 0.0
    %551 = vmatprep.subr.mxu0 0.0
    %552 = vmatpush2.msra.mxu0 0.0
    %553 = vmatprep.subr.mxu0 0.0
    %554 = vmatpush2.msra.mxu0 0.0
    %555 = vmatprep.subr.mxu0 0.0
    %556 = vmatpush2.msra.mxu0 0.0
    %557 = vmatprep.subr.mxu0 0.0
    %558 = vmatpush2.msra.mxu0 0.0
    %559 = vmatprep.subr.mxu0 0.0
    %560 = vmatpush2.msra.mxu0 0.0
    %561 = vmatprep.subr.mxu0 0.0
    %562 = vmatpush2.msra.mxu0 0.0
    %563 = vmatprep.subr.mxu0 0.0
    %564 = vmatpush2.msra.mxu0 0.0
    %565 = vmatprep.subr.mxu0 0.0
    %566 = vmatpush2.msra.mxu0 0.0
    %567 = vmatprep.subr.mxu0 0.0
    %568 = vmatpush2.msra.mxu0 0.0
    %569 = vmatprep.subr.mxu0 0.0
    %570 = vmatpush2.msra.mxu0 0.0
    %571 = vmatprep.subr.mxu0 0.0
    %572 = vmatpush2.msra.mxu0 0.0
    %573 = vmatprep.subr.mxu0 0.0
    %574 = vmatpush2.msra.mxu0 0.0
    %575 = vmatprep.mubr.f32.mxu0 0.0
    %576 = vmatmul.mubr.f32.gmra.mxu0 %v509
    %v577 = vpop.f32.mrf.mxu0
    %v578 = vadd.f32 0.0, %v577
    %v579 = vpop.f32.mrf.mxu0
    %580 = vdwg.mxu0
    %v581 = vsub.f32 %v305, %v504
    %583 = vrot.lane.b32.xlu0 %v578, 64
    %v584 = vpop.permute.xlu0 %583
    %v586 = vsub.f32 %v305, %v584
    %v587 = vmul.f32 %v581, %v581
    %vm588 = vcmask 254976
    %v589 = vsel %vm588, %v587, 0.0
    %590 = vadd.xlane.f32.xlu0 %v589
    %v591 = vpop.xlane.xlu0 %590
    %vm592 = vcmask 1041408
    %v593 = vsel %vm592, %v591, 0.0
    %v594 = vrot.slane %v593, 4
    %v595 = vadd.f32 %v593, %v594
    %v596 = vrot.slane %v595, 2
    %v597 = vadd.f32 %v595, %v596
    %v598 = vrot.slane %v597, 1
    %v599 = vadd.f32 %v597, %v598
    %v600 = vmul.f32 %v599, 0.01953125
    %v601 = vmul.f32 %v586, %v586
    %603 = vrot.lane.b32.xlu0 %v601, 64
    %v604 = vpop.permute.xlu0 %603
    %v606 = vsel %vm588, %v604, 0.0
    %607 = vadd.xlane.f32.xlu0 %v606
    %v608 = vpop.xlane.xlu0 %607
    %v609 = vsel %vm592, %v608, 0.0
    %v610 = vrot.slane %v609, 4
    %v611 = vadd.f32 %v609, %v610
    %v612 = vrot.slane %v611, 2
    %v613 = vadd.f32 %v611, %v612
    %v614 = vrot.slane %v613, 1
    %v615 = vadd.f32 %v613, %v614
    %v616 = vmul.f32 %v615, 0.01953125
    %v617 = vsel %vm234, %v578, 0
    %619 = vmatprep.subr.mxu0 0.0
    %620 = vmatpush1.msra.mxu0 0.0
    %621 = vmatprep.subr.mxu0 0.0
    %622 = vmatpush1.msra.mxu0 0.0
    %623 = vmatprep.subr.mxu0 0.0
    %624 = vmatpush1.msra.mxu0 0.0
    %625 = vmatprep.subr.mxu0 0.0
    %626 = vmatpush1.msra.mxu0 0.0
    %627 = vmatprep.subr.mxu0 0.0
    %628 = vmatpush1.msra.mxu0 0.0
    %629 = vmatprep.subr.mxu0 0.0
    %630 = vmatpush1.msra.mxu0 0.0
    %631 = vmatprep.subr.mxu0 0.0
    %632 = vmatpush1.msra.mxu0 0.0
    %633 = vmatprep.subr.mxu0 0.0
    %634 = vmatpush1.msra.mxu0 0.0
    %635 = vmatprep.subr.mxu0 0.0
    %636 = vmatpush1.msra.mxu0 0.0
    %637 = vmatprep.subr.mxu0 0.0
    %638 = vmatpush1.msra.mxu0 0.0
    %639 = vmatprep.subr.mxu0 0.0
    %640 = vmatpush1.msra.mxu0 0.0
    %641 = vmatprep.subr.mxu0 0.0
    %642 = vmatpush1.msra.mxu0 0.0
    %643 = vmatprep.subr.mxu0 0.0
    %644 = vmatpush1.msra.mxu0 %v68
    %645 = vmatprep.subr.mxu0 0.0
    %646 = vmatpush1.msra.mxu0 %v67
    %647 = vmatprep.subr.mxu0 0.0
    %648 = vmatpush1.msra.mxu0 %v66
    %649 = vmatprep.subr.mxu0 0.0
    %650 = vmatpush1.msra.mxu0 %v65
    %651 = vmatprep.subr.mxu0 0.0
    %652 = vmatpush2.msra.mxu0 0.0
    %653 = vmatprep.subr.mxu0 0.0
    %654 = vmatpush2.msra.mxu0 0.0
    %655 = vmatprep.subr.mxu0 0.0
    %656 = vmatpush2.msra.mxu0 0.0
    %657 = vmatprep.subr.mxu0 0.0
    %658 = vmatpush2.msra.mxu0 0.0
    %659 = vmatprep.subr.mxu0 0.0
    %660 = vmatpush2.msra.mxu0 0.0
    %661 = vmatprep.subr.mxu0 0.0
    %662 = vmatpush2.msra.mxu0 0.0
    %663 = vmatprep.subr.mxu0 0.0
    %664 = vmatpush2.msra.mxu0 0.0
    %665 = vmatprep.subr.mxu0 0.0
    %666 = vmatpush2.msra.mxu0 0.0
    %667 = vmatprep.subr.mxu0 0.0
    %668 = vmatpush2.msra.mxu0 0.0
    %669 = vmatprep.subr.mxu0 0.0
    %670 = vmatpush2.msra.mxu0 0.0
    %671 = vmatprep.subr.mxu0 0.0
    %672 = vmatpush2.msra.mxu0 0.0
    %673 = vmatprep.subr.mxu0 0.0
    %674 = vmatpush2.msra.mxu0 0.0
    %675 = vmatprep.subr.mxu0 0.0
    %676 = vmatpush2.msra.mxu0 0.0
    %677 = vmatprep.subr.mxu0 0.0
    %678 = vmatpush2.msra.mxu0 0.0
    %679 = vmatprep.subr.mxu0 0.0
    %680 = vmatpush2.msra.mxu0 0.0
    %681 = vmatprep.subr.mxu0 0.0
    %682 = vmatpush2.msra.mxu0 0.0
    %683 = vmatprep.mubr.f32.mxu0 0.0
    %684 = vmatmul.mubr.f32.gmra.mxu0 %v617
    %v685 = vpop.f32.mrf.mxu0
    %v686 = vadd.f32 0.0, %v685
    %v687 = vpop.f32.mrf.mxu0
    %688 = vdwg.mxu0
    %v690 = vsel %vm234, %v504, 0
    %692 = vmatprep.subr.mxu0 0.0
    %693 = vmatpush1.msra.mxu0 0.0
    %694 = vmatprep.subr.mxu0 0.0
    %695 = vmatpush1.msra.mxu0 0.0
    %696 = vmatprep.subr.mxu0 0.0
    %697 = vmatpush1.msra.mxu0 0.0
    %698 = vmatprep.subr.mxu0 0.0
    %699 = vmatpush1.msra.mxu0 0.0
    %700 = vmatprep.subr.mxu0 0.0
    %701 = vmatpush1.msra.mxu0 0.0
    %702 = vmatprep.subr.mxu0 0.0
    %703 = vmatpush1.msra.mxu0 0.0
    %704 = vmatprep.subr.mxu0 0.0
    %705 = vmatpush1.msra.mxu0 0.0
    %706 = vmatprep.subr.mxu0 0.0
    %707 = vmatpush1.msra.mxu0 0.0
    %708 = vmatprep.subr.mxu0 0.0
    %709 = vmatpush1.msra.mxu0 0.0
    %710 = vmatprep.subr.mxu0 0.0
    %711 = vmatpush1.msra.mxu0 0.0
    %712 = vmatprep.subr.mxu0 0.0
    %713 = vmatpush1.msra.mxu0 0.0
    %714 = vmatprep.subr.mxu0 0.0
    %715 = vmatpush1.msra.mxu0 0.0
    %716 = vmatprep.subr.mxu0 0.0
    %717 = vmatpush1.msra.mxu0 %v64
    %718 = vmatprep.subr.mxu0 0.0
    %719 = vmatpush1.msra.mxu0 %v63
    %720 = vmatprep.subr.mxu0 0.0
    %721 = vmatpush1.msra.mxu0 %v62
    %722 = vmatprep.subr.mxu0 0.0
    %723 = vmatpush1.msra.mxu0 %v61
    %724 = vmatprep.subr.mxu0 0.0
    %725 = vmatpush2.msra.mxu0 0.0
    %726 = vmatprep.subr.mxu0 0.0
    %727 = vmatpush2.msra.mxu0 0.0
    %728 = vmatprep.subr.mxu0 0.0
    %729 = vmatpush2.msra.mxu0 0.0
    %730 = vmatprep.subr.mxu0 0.0
    %731 = vmatpush2.msra.mxu0 0.0
    %732 = vmatprep.subr.mxu0 0.0
    %733 = vmatpush2.msra.mxu0 0.0
    %734 = vmatprep.subr.mxu0 0.0
    %735 = vmatpush2.msra.mxu0 0.0
    %736 = vmatprep.subr.mxu0 0.0
    %737 = vmatpush2.msra.mxu0 0.0
    %738 = vmatprep.subr.mxu0 0.0
    %739 = vmatpush2.msra.mxu0 0.0
    %740 = vmatprep.subr.mxu0 0.0
    %741 = vmatpush2.msra.mxu0 0.0
    %742 = vmatprep.subr.mxu0 0.0
    %743 = vmatpush2.msra.mxu0 0.0
    %744 = vmatprep.subr.mxu0 0.0
    %745 = vmatpush2.msra.mxu0 0.0
    %746 = vmatprep.subr.mxu0 0.0
    %747 = vmatpush2.msra.mxu0 0.0
    %748 = vmatprep.subr.mxu0 0.0
    %749 = vmatpush2.msra.mxu0 0.0
    %750 = vmatprep.subr.mxu0 0.0
    %751 = vmatpush2.msra.mxu0 0.0
    %752 = vmatprep.subr.mxu0 0.0
    %753 = vmatpush2.msra.mxu0 0.0
    %754 = vmatprep.subr.mxu0 0.0
    %755 = vmatpush2.msra.mxu0 0.0
    %756 = vmatprep.mubr.f32.mxu0 0.0
    %757 = vmatmul.mubr.f32.gmra.mxu0 %v690
    %v758 = vpop.f32.mrf.mxu0
    %v759 = vadd.f32 %v686, %v758
    %v760 = vpop.f32.mrf.mxu0
    %761 = vdwg.mxu0
    %v762 = vlaneseq
    %v763 = vshrl.u32 %v762, 7
    %v764 = vsub.s32 0, %v763
    %v765 = vrot.slane %v36, %v764
    %v766 = vadd.f32 %v759, %v765
    %vm767 = vcmask 15360
    %v769 = vsel %vm767, %v73, 0
    %v772 = vsel %vm767, %v74, 0
    %v775 = vsel %vm592, %v766, 0
    %777 = vmatprep.subr.mxu0 0.0
    %778 = vmatpush1.msra.mxu0 0.0
    %779 = vmatprep.subr.mxu0 0.0
    %780 = vmatpush1.msra.mxu0 0.0
    %781 = vmatprep.subr.mxu0 0.0
    %782 = vmatpush1.msra.mxu0 0.0
    %783 = vmatprep.subr.mxu0 0.0
    %784 = vmatpush1.msra.mxu0 0.0
    %785 = vmatprep.subr.mxu0 0.0
    %786 = vmatpush1.msra.mxu0 0.0
    %787 = vmatprep.subr.mxu0 0.0
    %788 = vmatpush1.msra.mxu0 0.0
    %789 = vmatprep.subr.mxu0 0.0
    %790 = vmatpush1.msra.mxu0 0.0
    %791 = vmatprep.subr.mxu0 0.0
    %792 = vmatpush1.msra.mxu0 0.0
    %793 = vmatprep.subr.mxu0 0.0
    %794 = vmatpush1.msra.mxu0 0.0
    %795 = vmatprep.subr.mxu0 0.0
    %796 = vmatpush1.msra.mxu0 0.0
    %797 = vmatprep.subr.mxu0 0.0
    %798 = vmatpush1.msra.mxu0 0.0
    %799 = vmatprep.subr.mxu0 0.0
    %800 = vmatpush1.msra.mxu0 0.0
    %801 = vmatprep.subr.mxu0 0.0
    %802 = vmatpush1.msra.mxu0 0.0
    %803 = vmatprep.subr.mxu0 0.0
    %804 = vmatpush1.msra.mxu0 0.0
    %805 = vmatprep.subr.mxu0 0.0
    %806 = vmatpush1.msra.mxu0 0.0
    %807 = vmatprep.subr.mxu0 0.0
    %808 = vmatpush1.msra.mxu0 %v775
    %809 = vmatprep.subr.mxu0 0.0
    %810 = vmatpush2.msra.mxu0 0.0
    %811 = vmatprep.subr.mxu0 0.0
    %812 = vmatpush2.msra.mxu0 0.0
    %813 = vmatprep.subr.mxu0 0.0
    %814 = vmatpush2.msra.mxu0 0.0
    %815 = vmatprep.subr.mxu0 0.0
    %816 = vmatpush2.msra.mxu0 0.0
    %817 = vmatprep.subr.mxu0 0.0
    %818 = vmatpush2.msra.mxu0 0.0
    %819 = vmatprep.subr.mxu0 0.0
    %820 = vmatpush2.msra.mxu0 0.0
    %821 = vmatprep.subr.mxu0 0.0
    %822 = vmatpush2.msra.mxu0 0.0
    %823 = vmatprep.subr.mxu0 0.0
    %824 = vmatpush2.msra.mxu0 0.0
    %825 = vmatprep.subr.mxu0 0.0
    %826 = vmatpush2.msra.mxu0 0.0
    %827 = vmatprep.subr.mxu0 0.0
    %828 = vmatpush2.msra.mxu0 0.0
    %829 = vmatprep.subr.mxu0 0.0
    %830 = vmatpush2.msra.mxu0 0.0
    %831 = vmatprep.subr.mxu0 0.0
    %832 = vmatpush2.msra.mxu0 0.0
    %833 = vmatprep.subr.mxu0 0.0
    %834 = vmatpush2.msra.mxu0 0.0
    %835 = vmatprep.subr.mxu0 0.0
    %836 = vmatpush2.msra.mxu0 0.0
    %837 = vmatprep.subr.mxu0 0.0
    %838 = vmatpush2.msra.mxu0 0.0
    %839 = vmatprep.subr.mxu0 0.0
    %840 = vmatpush2.msra.mxu0 0.0
    %841 = vmatprep.mubr.f32.mxu0 0.0
    %842 = vmatmul.mubr.f32.gmra.mxu0 %v769
    %v843 = vpop.f32.mrf.mxu0
    %v844 = vadd.f32 0.0, %v843
    %v845 = vpop.f32.mrf.mxu0
    %846 = vmatprep.mubr.f32.mxu0 0.0
    %847 = vmatmul.mubr.f32.gmra.mxu0 %v772
    %v848 = vpop.f32.mrf.mxu0
    %v849 = vadd.f32 0.0, %v848
    %v850 = vpop.f32.mrf.mxu0
    %851 = vdwg.mxu0
    %v853 = vsel %vm234, %v149, 0
    %v856 = vsel %vm234, %v154, 0
    %858 = vmatprep.subr.mxu0 0.0
    %859 = vmatpush1.msra.mxu0 0.0
    %860 = vmatprep.subr.mxu0 0.0
    %861 = vmatpush1.msra.mxu0 0.0
    %862 = vmatprep.subr.mxu0 0.0
    %863 = vmatpush1.msra.mxu0 0.0
    %864 = vmatprep.subr.mxu0 0.0
    %865 = vmatpush1.msra.mxu0 0.0
    %866 = vmatprep.subr.mxu0 0.0
    %867 = vmatpush1.msra.mxu0 0.0
    %868 = vmatprep.subr.mxu0 0.0
    %869 = vmatpush1.msra.mxu0 0.0
    %870 = vmatprep.subr.mxu0 0.0
    %871 = vmatpush1.msra.mxu0 0.0
    %872 = vmatprep.subr.mxu0 0.0
    %873 = vmatpush1.msra.mxu0 0.0
    %874 = vmatprep.subr.mxu0 0.0
    %875 = vmatpush1.msra.mxu0 0.0
    %876 = vmatprep.subr.mxu0 0.0
    %877 = vmatpush1.msra.mxu0 0.0
    %878 = vmatprep.subr.mxu0 0.0
    %879 = vmatpush1.msra.mxu0 0.0
    %880 = vmatprep.subr.mxu0 0.0
    %881 = vmatpush1.msra.mxu0 0.0
    %882 = vmatprep.subr.mxu0 0.0
    %883 = vmatpush1.msra.mxu0 %v60
    %884 = vmatprep.subr.mxu0 0.0
    %885 = vmatpush1.msra.mxu0 %v59
    %886 = vmatprep.subr.mxu0 0.0
    %887 = vmatpush1.msra.mxu0 %v58
    %888 = vmatprep.subr.mxu0 0.0
    %889 = vmatpush1.msra.mxu0 %v57
    %890 = vmatprep.subr.mxu0 0.0
    %891 = vmatpush2.msra.mxu0 0.0
    %892 = vmatprep.subr.mxu0 0.0
    %893 = vmatpush2.msra.mxu0 0.0
    %894 = vmatprep.subr.mxu0 0.0
    %895 = vmatpush2.msra.mxu0 0.0
    %896 = vmatprep.subr.mxu0 0.0
    %897 = vmatpush2.msra.mxu0 0.0
    %898 = vmatprep.subr.mxu0 0.0
    %899 = vmatpush2.msra.mxu0 0.0
    %900 = vmatprep.subr.mxu0 0.0
    %901 = vmatpush2.msra.mxu0 0.0
    %902 = vmatprep.subr.mxu0 0.0
    %903 = vmatpush2.msra.mxu0 0.0
    %904 = vmatprep.subr.mxu0 0.0
    %905 = vmatpush2.msra.mxu0 0.0
    %906 = vmatprep.subr.mxu0 0.0
    %907 = vmatpush2.msra.mxu0 0.0
    %908 = vmatprep.subr.mxu0 0.0
    %909 = vmatpush2.msra.mxu0 0.0
    %910 = vmatprep.subr.mxu0 0.0
    %911 = vmatpush2.msra.mxu0 0.0
    %912 = vmatprep.subr.mxu0 0.0
    %913 = vmatpush2.msra.mxu0 0.0
    %914 = vmatprep.subr.mxu0 0.0
    %915 = vmatpush2.msra.mxu0 0.0
    %916 = vmatprep.subr.mxu0 0.0
    %917 = vmatpush2.msra.mxu0 0.0
    %918 = vmatprep.subr.mxu0 0.0
    %919 = vmatpush2.msra.mxu0 0.0
    %920 = vmatprep.subr.mxu0 0.0
    %921 = vmatpush2.msra.mxu0 0.0
    %922 = vmatprep.mubr.f32.mxu0 0.0
    %923 = vmatmul.mubr.f32.gmra.mxu0 %v853
    %v924 = vpop.f32.mrf.mxu0
    %v925 = vadd.f32 %v844, %v924
    %v926 = vpop.f32.mrf.mxu0
    %927 = vmatprep.mubr.f32.mxu0 0.0
    %928 = vmatmul.mubr.f32.gmra.mxu0 %v856
    %v929 = vpop.f32.mrf.mxu0
    %v930 = vadd.f32 %v849, %v929
    %v931 = vpop.f32.mrf.mxu0
    %932 = vdwg.mxu0
    %v933 = vtanh.pop %v925
    %v934 = vtanh.pop %v930
    %v935 = vlaneseq
    %v936 = vshrl.u32 %v935, 7
    %v937 = vsub.s32 0, %v936
    %v938 = vrot.slane %v37, %v937
    %v940 = vsel %vm234, %v933, 0
    %v943 = vsel %vm234, %v934, 0
    %945 = vmatprep.subr.mxu0 0.0
    %946 = vmatpush1.msra.mxu0 0.0
    %947 = vmatprep.subr.mxu0 0.0
    %948 = vmatpush1.msra.mxu0 0.0
    %949 = vmatprep.subr.mxu0 0.0
    %950 = vmatpush1.msra.mxu0 0.0
    %951 = vmatprep.subr.mxu0 0.0
    %952 = vmatpush1.msra.mxu0 0.0
    %953 = vmatprep.subr.mxu0 0.0
    %954 = vmatpush1.msra.mxu0 0.0
    %955 = vmatprep.subr.mxu0 0.0
    %956 = vmatpush1.msra.mxu0 0.0
    %957 = vmatprep.subr.mxu0 0.0
    %958 = vmatpush1.msra.mxu0 0.0
    %959 = vmatprep.subr.mxu0 0.0
    %960 = vmatpush1.msra.mxu0 0.0
    %961 = vmatprep.subr.mxu0 0.0
    %962 = vmatpush1.msra.mxu0 0.0
    %963 = vmatprep.subr.mxu0 0.0
    %964 = vmatpush1.msra.mxu0 0.0
    %965 = vmatprep.subr.mxu0 0.0
    %966 = vmatpush1.msra.mxu0 0.0
    %967 = vmatprep.subr.mxu0 0.0
    %968 = vmatpush1.msra.mxu0 0.0
    %969 = vmatprep.subr.mxu0 0.0
    %970 = vmatpush1.msra.mxu0 %v72
    %971 = vmatprep.subr.mxu0 0.0
    %972 = vmatpush1.msra.mxu0 %v71
    %973 = vmatprep.subr.mxu0 0.0
    %974 = vmatpush1.msra.mxu0 %v70
    %975 = vmatprep.subr.mxu0 0.0
    %976 = vmatpush1.msra.mxu0 %v69
    %977 = vmatprep.subr.mxu0 0.0
    %978 = vmatpush2.msra.mxu0 0.0
    %979 = vmatprep.subr.mxu0 0.0
    %980 = vmatpush2.msra.mxu0 0.0
    %981 = vmatprep.subr.mxu0 0.0
    %982 = vmatpush2.msra.mxu0 0.0
    %983 = vmatprep.subr.mxu0 0.0
    %984 = vmatpush2.msra.mxu0 0.0
    %985 = vmatprep.subr.mxu0 0.0
    %986 = vmatpush2.msra.mxu0 0.0
    %987 = vmatprep.subr.mxu0 0.0
    %988 = vmatpush2.msra.mxu0 0.0
    %989 = vmatprep.subr.mxu0 0.0
    %990 = vmatpush2.msra.mxu0 0.0
    %991 = vmatprep.subr.mxu0 0.0
    %992 = vmatpush2.msra.mxu0 0.0
    %993 = vmatprep.subr.mxu0 0.0
    %994 = vmatpush2.msra.mxu0 0.0
    %995 = vmatprep.subr.mxu0 0.0
    %996 = vmatpush2.msra.mxu0 0.0
    %997 = vmatprep.subr.mxu0 0.0
    %998 = vmatpush2.msra.mxu0 0.0
    %999 = vmatprep.subr.mxu0 0.0
    %1000 = vmatpush2.msra.mxu0 0.0
    %1001 = vmatprep.subr.mxu0 0.0
    %1002 = vmatpush2.msra.mxu0 0.0
    %1003 = vmatprep.subr.mxu0 0.0
    %1004 = vmatpush2.msra.mxu0 0.0
    %1005 = vmatprep.subr.mxu0 0.0
    %1006 = vmatpush2.msra.mxu0 0.0
    %1007 = vmatprep.subr.mxu0 0.0
    %1008 = vmatpush2.msra.mxu0 0.0
    %1009 = vmatprep.mubr.f32.mxu0 0.0
    %1010 = vmatmul.mubr.f32.gmra.mxu0 %v940
    %v1011 = vpop.f32.mrf.mxu0
    %v1012 = vadd.f32 %v938, %v1011
    %v1013 = vpop.f32.mrf.mxu0
    %1014 = vmatprep.mubr.f32.mxu0 0.0
    %1015 = vmatmul.mubr.f32.gmra.mxu0 %v943
    %v1016 = vpop.f32.mrf.mxu0
    %v1017 = vadd.f32 %v938, %v1016
    %v1018 = vpop.f32.mrf.mxu0
    %1019 = vdwg.mxu0
    %1020 = vst [vmem:[%s2] sm:$0xff] %v1012
    %1021 = vst [vmem:[%s2 + $0x8] sm:$0xff] %v1017
    %1022 = vst [vmem:[%s2 + $0x10] sm:$0x3] %v305
    %v1023 = vlaneseq
    %v1024 = vshrl.u32 %v1023, 7
    %vm1025 = vcmp.eq.s32.totalorder %v1024, 0
    %vm1026 = vcmp.eq.s32.totalorder %v383, 0
    %vm1027 = vmand %vm1025, %vm1026
    %vm1028 = vcmp.eq.s32.totalorder %v383, 1
    %vm1029 = vmand %vm1025, %vm1028
    %v1030 = vsel %vm1029, %v616, 0.0
    %v1031 = vsel %vm1027, %v600, %v1030
    %1032 = vst [vmem:[%s2 + $0x12] sm:$0x3f] %v1031
    // Predicated region
    $region14: #{vq_vae_idx_forward.1} parent=1 // pred_check
      _
    $region15: #{vq_vae_idx_forward.1} parent=1 // pred_check_branch
      %1034 = sbr.rel (0) target = $region17
    $region16: #{vq_vae_idx_forward.1} parent=1 // pred_region
      _
    $region17: #{vq_vae_idx_forward.1} parent=1 // pred_fallthru
      _
    // Predicated region
    $region18: #{vq_vae_idx_forward.1} parent=1 // pred_check
      _
    $region19: #{vq_vae_idx_forward.1} parent=1 // pred_check_branch
      %1036 = sbr.rel (0) target = $region21
    $region20: #{vq_vae_idx_forward.1} parent=1 // pred_region
      _
    $region21: #{vq_vae_idx_forward.1} parent=1 // pred_fallthru
      _
    %1037 = vsyncpa [#allocation3], 1

</llo_original>
